<compile_context>
chip_gen: v7x
topology: tpu7x:2x2x1
jax: 0.10.0
libtpu: 0.0.40
codegen_flags: <defaults>
</compile_context>

<pallas_src>
import functools

import jax
import jax.numpy as jnp
from jax.experimental import pallas as pl
from jax.experimental.pallas import tpu as pltpu


# -----------------------------------------------------------------------------
# Per-step kernel: the entire update lives on the scalar path (SMEM only).
# -----------------------------------------------------------------------------
def _mean_step_kernel(count_ref, total_ref, loss_ref,
                      new_count_ref, new_total_ref, mean_ref):
    # All refs are SMEM scalars: two scalar adds, one scalar int->float cast,
    # one scalar divide. No vector loads/stores, no vreg pressure.
    new_count = count_ref[0] + 1                       # int32 scalar
    new_total = total_ref[0] + loss_ref[0]             # float32 scalar
    new_count_ref[0] = new_count
    new_total_ref[0] = new_total
    mean_ref[0] = new_total / new_count.astype(jnp.float32)


@functools.partial(jax.jit, donate_argnums=(0, 1))
def mean_update(count, total, loss):
    """One Mean.forward(loss) step: returns (new_count, new_total, mean)."""
    loss = jnp.asarray(loss, jnp.float32).reshape((1,))
    smem = pl.BlockSpec(memory_space=pltpu.SMEM)
    return pl.pallas_call(
        _mean_step_kernel,
        grid=(),
        in_specs=[smem, smem, smem],
        out_specs=(smem, smem, smem),
        out_shape=(
            jax.ShapeDtypeStruct((1,), jnp.int32),     # new_count (aliases count)
            jax.ShapeDtypeStruct((1,), jnp.float32),   # new_total (aliases total)
            jax.ShapeDtypeStruct((1,), jnp.float32),   # mean (returned value)
        ),
        input_output_aliases={0: 0, 1: 1},             # in-place running state (P8)
    )(count, total, loss)


# -----------------------------------------------------------------------------
# Batched kernel: N forward() steps in one call, lane-dense (1, n_pad) layout.
# -----------------------------------------------------------------------------
def _mean_batched_kernel(n, count_ref, total_ref, loss_ref,
                         new_count_ref, new_total_ref, means_ref):
    n_pad = loss_ref.shape[1]
    losses = loss_ref[...]                              # (1, n_pad) f32, zero-padded
    count0 = count_ref[0]                               # int32 scalar (SMEM)
    total0 = total_ref[0]                               # float32 scalar (SMEM)

    # Inclusive prefix sum along the lane axis via a triangular ones matrix on
    # the MXU: csum[0, j] = sum_{i <= j} losses[0, i].
    row = jax.lax.broadcasted_iota(jnp.int32, (n_pad, n_pad), 0)
    col = jax.lax.broadcasted_iota(jnp.int32, (n_pad, n_pad), 1)
    tri = jnp.where(row <= col, 1.0, 0.0).astype(jnp.float32)
    csum = jnp.dot(losses, tri, preferred_element_type=jnp.float32)   # (1, n_pad)

    step = jax.lax.broadcasted_iota(jnp.int32, (1, n_pad), 1)          # 0..n_pad-1
    denom = (count0 + 1 + step).astype(jnp.float32)                    # running count
    means_ref[...] = (total0 + csum) / denom                           # lane-dense out

    new_count_ref[0] = count0 + n
    new_total_ref[...] = total0 + jnp.sum(losses, axis=1, keepdims=True)


@jax.jit
def mean_update_batched(count, total, losses):
    """Apply N Mean.forward steps in ONE pallas_call.

    Returns (new_count, new_total, running_means); running_means[j] is what
    Mean.forward would have returned for losses[j].
    """
    n = losses.shape[0]
    n_pad = max(128, ((n + 127) // 128) * 128)          # lane-dense multiple of 128
    losses_pad = jnp.zeros((1, n_pad), jnp.float32).at[0, :n].set(
        losses.astype(jnp.float32))

    smem = pl.BlockSpec(memory_space=pltpu.SMEM)
    new_count, new_total, means = pl.pallas_call(
        functools.partial(_mean_batched_kernel, n),
        grid=(),
        in_specs=[smem, smem, pl.BlockSpec((1, n_pad), lambda: (0, 0))],
        out_specs=(
            smem,
            pl.BlockSpec((1, 1), lambda: (0, 0)),
            pl.BlockSpec((1, n_pad), lambda: (0, 0)),
        ),
        out_shape=(
            jax.ShapeDtypeStruct((1,), jnp.int32),       # new_count
            jax.ShapeDtypeStruct((1, 1), jnp.float32),   # new_total
            jax.ShapeDtypeStruct((1, n_pad), jnp.float32),  # running means
        ),
    )(count, total, losses_pad)
    return new_count, new_total.reshape((1,)), means[0, :n]


class Mean:
    """Functional-state mirror of the PyTorch Mean module."""

    def __init__(self):
        self.reset_states()

    def reset_states(self):
        self.count = jnp.zeros((1,), jnp.int32)
        self.total = jnp.zeros((1,), jnp.float32)

    def forward(self, loss):
        self.count, self.total, mean = mean_update(self.count, self.total, loss)
        return mean                                      # shape (1,) float32

    __call__ = forward

    def result(self):
        # Mirrors: total / count if count != 0 else 0.0  (plain-JAX glue)
        c = self.count[0]
        return jnp.where(c != 0,
                         self.total[0] / jnp.maximum(c, 1).astype(jnp.float32),
                         0.0)


if __name__ == "__main__":
    import numpy as np

    key = jax.random.PRNGKey(0)
    n_steps = 6
    # Quantize losses to multiples of 1/8 so every accumulation path (scalar
    # adds, MXU prefix sums) is exact and the checks stay tight.
    raw = jax.random.uniform(key, (n_steps,), dtype=jnp.float32)
    losses = jnp.floor(raw * 16.0) / 8.0                 # values in [0, 2)

    losses_np = np.asarray(losses, dtype=np.float64)
    ref_means = np.cumsum(losses_np) / np.arange(1, n_steps + 1)

    # --- per-step path: one scalar-only kernel call per Mean.forward() ---
    metric = Mean()
    got = []
    for i in range(n_steps):
        got.append(metric.forward(losses[i]))
    got_np = np.array(
        [np.asarray(jax.block_until_ready(g)).reshape(()) for g in got])
    np.testing.assert_allclose(got_np, ref_means, rtol=1e-6, atol=1e-6)

    final = np.asarray(jax.block_until_ready(metric.result())).reshape(())
    np.testing.assert_allclose(final, ref_means[-1], rtol=1e-6, atol=1e-6)

    # --- batched path: all n_steps updates in a single pallas_call ---
    count0 = jnp.zeros((1,), jnp.int32)
    total0 = jnp.zeros((1,), jnp.float32)
    new_count, new_total, means = jax.block_until_ready(
        mean_update_batched(count0, total0, losses))
    np.testing.assert_allclose(np.asarray(means), ref_means, rtol=1e-5, atol=1e-5)
    assert int(new_count[0]) == n_steps
    np.testing.assert_allclose(float(new_total[0]), losses_np.sum(),
                               rtol=1e-6, atol=1e-6)

    print("KERNEL_OK")
</pallas_src>

<mosaic_0001>
module attributes {stable_mosaic.version = 11 : i64} {
  func.func @_mean_step_kernel(%arg0: memref<1xi32, #tpu.memory_space<smem>>, %arg1: memref<1xf32, #tpu.memory_space<smem>>, %arg2: memref<1xf32, #tpu.memory_space<smem>>, %arg3: memref<1xi32, #tpu.memory_space<smem>>, %arg4: memref<1xf32, #tpu.memory_space<smem>>, %arg5: memref<1xf32, #tpu.memory_space<smem>>) attributes {dimension_semantics = [], scalar_prefetch = 0 : i64, scratch_operands = 0 : i64, tpu.core_type = #tpu.core_type<tc>} {
    %c0 = arith.constant 0 : index
    %0 = memref.load %arg0[%c0] : memref<1xi32, #tpu.memory_space<smem>>
    %c1_i32 = arith.constant 1 : i32
    %1 = arith.addi %0, %c1_i32 : i32
    %c0_0 = arith.constant 0 : index
    %2 = memref.load %arg1[%c0_0] : memref<1xf32, #tpu.memory_space<smem>>
    %c0_1 = arith.constant 0 : index
    %3 = memref.load %arg2[%c0_1] : memref<1xf32, #tpu.memory_space<smem>>
    %4 = arith.addf %2, %3 : f32
    %c0_2 = arith.constant 0 : index
    %5 = memref.load %arg3[%c0_2] : memref<1xi32, #tpu.memory_space<smem>>
    memref.store %1, %arg3[%c0_2] : memref<1xi32, #tpu.memory_space<smem>>
    %c0_3 = arith.constant 0 : index
    %6 = memref.load %arg4[%c0_3] : memref<1xf32, #tpu.memory_space<smem>>
    memref.store %4, %arg4[%c0_3] : memref<1xf32, #tpu.memory_space<smem>>
    %7 = arith.sitofp %1 : i32 to f32
    %8 = arith.divf %4, %7 : f32
    %c0_4 = arith.constant 0 : index
    %9 = memref.load %arg5[%c0_4] : memref<1xf32, #tpu.memory_space<smem>>
    memref.store %8, %arg5[%c0_4] : memref<1xf32, #tpu.memory_space<smem>>
    return
  }
}

</mosaic_0001>

<llo_original>
// kernel: mean_update.1
$region0: #{mean_update.1}
  #allocation0 [shape = 'u32[]', space=smem, size = 0x4, offset = 0x4, fixed_abs, tag = 'smem constant byte address 0x4 - core index']
  #allocation1 [shape = 'u32[144,128]{1,0:T(1,128)}', space=vmem, size = 0x12000, scoped, tag = 'internal scratch']
  #allocation2 [shape = 's32[1]{0:T(128)S(6)}', space=smem, size = 0x200, scoped, tag = 'scoped memory for mean_update.1']
  #allocation3 [shape = 'f32[1]{0:T(128)S(6)}', space=smem, size = 0x200, scoped, tag = 'scoped memory for mean_update.1']
  #allocation4 [shape = 'f32[1]{0:T(128)S(6)}', space=smem, size = 0x200, scoped, tag = 'scoped memory for mean_update.1']
  %s0 = inlined_call_operand.<no memory space> [shape: s32[1], index: 0, kind: input, shape index: {}, may-alias: {0,3}]
  %s1 = inlined_call_operand.<no memory space> [shape: f32[1], index: 1, kind: input, shape index: {}, may-alias: {1,4}]
  %s2 = inlined_call_operand.<no memory space> [shape: f32[1], index: 2, kind: input, shape index: {}]
  %s3 = inlined_call_operand.hbm [shape: s32[1], index: 3, kind: output, shape index: {0}, may-alias: {0,3}]
  %s4 = inlined_call_operand.hbm [shape: f32[1], index: 4, kind: output, shape index: {1}, may-alias: {1,4}]
  %s5 = inlined_call_operand.hbm [shape: f32[1], index: 5, kind: output, shape index: {2}]
  %6 = xla_tuple %s3, %s4, %s5
  %s7 = sld [smem:[#allocation0]]
  $region38: #{mean_update.1} parent=0
    _
  %s9 = ssub.s32 1, %s7
  %s10 = scalar_select 0, %s9, %s7
  %11 = sst [smem:[#allocation2]] %s0
  %12 = sst [smem:[#allocation3]] %s1
  %13 = sst [smem:[#allocation4]] %s2
  $region1: #{mean_update.1} parent=0
    #allocation5 [shape = 'u8[512]{0}', space=smem, size = 0x200, scoped, tag = 'output window, operand 0, single buffered']
    #allocation6 [shape = 's32[1]{0}', space=sflag, size = 0x4, scoped, tag = 'scoped memory for mean_update.1']
    #allocation7 [shape = 'u8[512]{0}', space=smem, size = 0x200, scoped, tag = 'output window, operand 1, single buffered']
    #allocation8 [shape = 's32[1]{0}', space=sflag, size = 0x4, scoped, tag = 'scoped memory for mean_update.1']
    #allocation9 [shape = 'u8[512]{0}', space=smem, size = 0x200, scoped, tag = 'output window, operand 2, single buffered']
    %14 = vsyncpa [#allocation6], 0
    %15 = vsyncpa [#allocation8], 0
    // Predicated region
    $region2: #{mean_update.1} parent=1 // pred_check
      _
    $region3: #{mean_update.1} parent=1 // pred_check_branch
      %17 = sbr.rel (0) target = $region5
    $region4: #{mean_update.1} parent=1 // pred_region
      _
    $region5: #{mean_update.1} parent=1 // pred_fallthru
      _
    // Predicated region
    $region6: #{mean_update.1} parent=1 // pred_check
      _
    $region7: #{mean_update.1} parent=1 // pred_check_branch
      %19 = sbr.rel (0) target = $region9
    $region8: #{mean_update.1} parent=1 // pred_region
      _
    $region9: #{mean_update.1} parent=1 // pred_fallthru
      _
    // Predicated region
    $region10: #{mean_update.1} parent=1 // pred_check
      _
    $region11: #{mean_update.1} parent=1 // pred_check_branch
      %21 = sbr.rel (0) target = $region13
    $region12: #{mean_update.1} parent=1 // pred_region
      _
    $region13: #{mean_update.1} parent=1 // pred_fallthru
      _
    %s22 = sld [smem:[#allocation2]]
    %s23 = sadd.s32 %s22, 1
    %s24 = sld [smem:[#allocation3]]
    %s25 = sld [smem:[#allocation4]]
    %s26 = sadd.f32 %s24, %s25
    %s27 = scalar_lea.smem [#allocation5], 0
    %28 = sst [smem:[%s27]] %s23
    %s29 = scalar_lea.smem [#allocation7], 0
    %30 = sst [smem:[%s29]] %s26
    %s31 = scvt.s32.f32 %s23
    %v32 = vstv %s31
    %v33 = vrcp.pop %v32
    %s34 = vtos %v33
    %s35 = smul.f32 %s26, %s34
    %s36 = scalar_lea.smem [#allocation9], 0
    %37 = sst [smem:[%s36]] %s35
    // Predicated region
    $region14: #{mean_update.1} parent=1 // pred_check
      _
    $region15: #{mean_update.1} parent=1 // pred_check_branch
      %39 = sbr.rel (0) target = $region17
    $region16: #{mean_update.1} parent=1 // pred_region
      %s41 = ssub.s32 16, 16
      %42 = vsyncadd [#allocation6], %s41
      %45 = dma.smem_to_hbm [#allocation5], 16, %s3, [#allocation6]
    $region17: #{mean_update.1} parent=1 // pred_fallthru
      _
    // Predicated region
    $region18: #{mean_update.1} parent=1 // pred_check
      _
    $region19: #{mean_update.1} parent=1 // pred_check_branch
      %47 = sbr.rel (0) target = $region21
    $region20: #{mean_update.1} parent=1 // pred_region
      %s49 = ssub.s32 16, 16
      %50 = vsyncadd [#allocation8], %s49
      %53 = dma.smem_to_hbm [#allocation7], 16, %s4, [#allocation8]
    $region21: #{mean_update.1} parent=1 // pred_fallthru
      _
    // Predicated region
    $region22: #{mean_update.1} parent=1 // pred_check
      _
    $region23: #{mean_update.1} parent=1 // pred_check_branch
      %55 = sbr.rel (0) target = $region25
    $region24: #{mean_update.1} parent=1 // pred_region
      %s57 = ssub.s32 16, 16
      %58 = vsyncadd [#allocation8], %s57
      %61 = dma.smem_to_hbm [#allocation9], 16, %s5, [#allocation8]
    $region25: #{mean_update.1} parent=1 // pred_fallthru
      _
    // Predicated region
    $region26: #{mean_update.1} parent=1 // pred_check
      _
    $region27: #{mean_update.1} parent=1 // pred_check_branch
      %63 = sbr.rel (0) target = $region29
    $region28: #{mean_update.1} parent=1 // pred_region
      %64 = dma.done [#allocation6], 16
    $region29: #{mean_update.1} parent=1 // pred_fallthru
      _
    // Predicated region
    $region30: #{mean_update.1} parent=1 // pred_check
      _
    $region31: #{mean_update.1} parent=1 // pred_check_branch
      %66 = sbr.rel (0) target = $region33
    $region32: #{mean_update.1} parent=1 // pred_region
      %67 = dma.done [#allocation8], 16
    $region33: #{mean_update.1} parent=1 // pred_fallthru
      _
    // Predicated region
    $region34: #{mean_update.1} parent=1 // pred_check
      _
    $region35: #{mean_update.1} parent=1 // pred_check_branch
      %69 = sbr.rel (0) target = $region37
    $region36: #{mean_update.1} parent=1 // pred_region
      %70 = dma.done [#allocation8], 16
    $region37: #{mean_update.1} parent=1 // pred_fallthru
      _
    %71 = sfence
    %72 = vsyncpa [#allocation6], 1
    %73 = vsyncpa [#allocation8], 1

</llo_original>
